<compile_context>
chip_gen: v5e
topology: v5e:2x2
jax: 0.10.0
libtpu: 0.0.40
codegen_flags: <defaults>
</compile_context>

<pallas_src>
import jax
import jax.numpy as jnp
from jax.experimental import pallas as pl
from jax.experimental.pallas import tpu as pltpu


def _round_up(x, m):
    return ((x + m - 1) // m) * m


def _spp_context_kernel(ctx_ref, w_ref, b_ref, out_ref):
    # ctx_ref: (TB, 2D)   dense context tile (already gathered / placeholder-selected)
    # w_ref  : (2D, D)    projection weight, pre-transposed so y = x @ W.T
    # b_ref  : (1, D)     projection bias
    # out_ref: (TB, D)
    acc = jnp.dot(ctx_ref[...], w_ref[...], preferred_element_type=jnp.float32)
    out_ref[...] = (acc + b_ref[...]).astype(out_ref.dtype)


def spp_context_forward(embeddings, end_node, current_node, i_step,
                        W_placeholder, W_proj, b_proj, *, block_b=None):
    """embeddings: (B, N, D); end_node/current_node: (B,) int; i_step: scalar int."""
    B, N, D = embeddings.shape

    # ---- context construction (tiny, data-dependent; done in XLA per perf review) ----
    bidx = jnp.arange(B)
    end_idx = jnp.clip(end_node.astype(jnp.int32), 0, N - 1)
    cur_idx = jnp.clip(current_node.astype(jnp.int32), 0, N - 1)
    end_e = embeddings[bidx, end_idx]                                # (B, D)
    cur_e = embeddings[bidx, cur_idx]                                # (B, D)
    gathered = jnp.concatenate([end_e, cur_e], axis=-1)              # (B, 2D)
    placeholder = jnp.broadcast_to(W_placeholder[None, :], (B, 2 * D))
    first_step = jnp.asarray(i_step, jnp.int32) < 1
    ctx = jnp.where(first_step, placeholder, gathered).astype(embeddings.dtype)

    # ---- batch tiling: TB rows per grid step, sublane/lane-dense blocks ----
    if block_b is None:
        block_b = min(256, _round_up(B, 8))   # 8-multiple; cap at MXU height
    B_pad = _round_up(B, block_b)
    if B_pad != B:
        ctx = jnp.pad(ctx, ((0, B_pad - B), (0, 0)))

    w_t = W_proj.T.astype(embeddings.dtype)            # (2D, D)
    bias = b_proj.reshape(1, D).astype(jnp.float32)    # (1, D)

    grid = (B_pad // block_b,)
    out = pl.pallas_call(
        _spp_context_kernel,
        grid_spec=pltpu.PrefetchScalarGridSpec(
            num_scalar_prefetch=0,
            grid=grid,
            in_specs=[
                pl.BlockSpec((block_b, 2 * D), lambda i: (i, 0)),   # context tile
                pl.BlockSpec((2 * D, D), lambda i: (0, 0)),         # weight (constant)
                pl.BlockSpec((1, D), lambda i: (0, 0)),             # bias (constant)
            ],
            out_specs=pl.BlockSpec((block_b, D), lambda i: (i, 0)),
        ),
        out_shape=jax.ShapeDtypeStruct((B_pad, D), embeddings.dtype),
        compiler_params=pltpu.CompilerParams(
            dimension_semantics=("parallel",)),
    )(ctx, w_t, bias)
    return out[:B]


def spp_context_reference(embeddings, end_node, current_node, i_step,
                          W_placeholder, W_proj, b_proj):
    B, N, D = embeddings.shape
    if int(i_step) < 1:
        ctx = jnp.broadcast_to(W_placeholder[None, :], (B, 2 * D))
    else:
        e = embeddings[jnp.arange(B), end_node]      # (B, D)
        c = embeddings[jnp.arange(B), current_node]  # (B, D)
        ctx = jnp.concatenate([e, c], axis=-1)       # (B, 2D)
    return ctx @ W_proj.T + b_proj


if __name__ == "__main__":
    B, N, D = 4, 8, 32      # batch, num_nodes, embedding_dim

    key = jax.random.PRNGKey(0)
    k_emb, k_wph, k_w, k_b, k_end, k_cur = jax.random.split(key, 6)

    embeddings = jax.random.normal(k_emb, (B, N, D), dtype=jnp.float32)

    # Deterministic parameter init (shapes from SPPContext.__init__)
    W_placeholder = jax.random.uniform(k_wph, (2 * D,), minval=-1.0, maxval=1.0,
                                       dtype=jnp.float32)
    bound = 1.0 / jnp.sqrt(2.0 * D)
    W_proj = jax.random.uniform(k_w, (D, 2 * D), minval=-bound, maxval=bound,
                                dtype=jnp.float32)          # nn.Linear weight (out, in)
    b_proj = jax.random.uniform(k_b, (D,), minval=-bound, maxval=bound,
                                dtype=jnp.float32)

    end_node = jax.random.randint(k_end, (B,), 0, N)
    current_node = jax.random.randint(k_cur, (B,), 0, N)

    # TODO(synk): multi-dimensional end_node case (node_dim = (n, -1)) not implemented;
    # only the 1-D end_node path of the PyTorch forward is covered.

    ok = True
    for i_step in (1, 0):   # gather branch and placeholder branch
        out = spp_context_forward(embeddings, end_node, current_node, i_step,
                                  W_placeholder, W_proj, b_proj)
        out = jax.block_until_ready(out)
        ref = spp_context_reference(embeddings, end_node, current_node, i_step,
                                    W_placeholder, W_proj, b_proj)
        ok = ok and bool(jnp.allclose(out, ref, rtol=1e-5, atol=1e-5))

    if ok:
        print("KERNEL_OK")
    else:
        print("KERNEL_MISMATCH")
</pallas_src>

<mosaic_0001>
module attributes {stable_mosaic.version = 11 : i64} {
  func.func @_spp_context_kernel(%arg0: i32, %arg1: memref<8x64xf32, #tpu.memory_space<vmem>>, %arg2: memref<64x32xf32, #tpu.memory_space<vmem>>, %arg3: memref<1x32xf32, #tpu.memory_space<vmem>>, %arg4: memref<8x32xf32, #tpu.memory_space<vmem>>) attributes {dimension_semantics = [#tpu.dimension_semantics<parallel>], iteration_bounds = array<i64: 1>, scalar_prefetch = 0 : i64, scratch_operands = 0 : i64, tpu.core_type = #tpu.core_type<tc>, window_params = [{transform_indices = @transform_0, window_bounds = array<i64: 8, 64>}, {pipeline_mode = #tpu.pipeline_mode<synchronous>, transform_indices = @transform_1, window_bounds = array<i64: 64, 32>}, {pipeline_mode = #tpu.pipeline_mode<synchronous>, transform_indices = @transform_2, window_bounds = array<i64: 1, 32>}, {transform_indices = @transform_3, window_bounds = array<i64: 8, 32>}]} {
    %c0 = arith.constant 0 : index
    %c0_0 = arith.constant 0 : index
    %0 = vector.load %arg1[%c0, %c0_0] : memref<8x64xf32, #tpu.memory_space<vmem>>, vector<8x64xf32>
    %c0_1 = arith.constant 0 : index
    %c0_2 = arith.constant 0 : index
    %1 = vector.load %arg2[%c0_1, %c0_2] : memref<64x32xf32, #tpu.memory_space<vmem>>, vector<64x32xf32>
    %cst = arith.constant dense<0.000000e+00> : vector<8x32xf32>
    %2 = tpu.matmul %0, %1, %cst {dimension_numbers = #tpu.dot_dimension_numbers<[1], [0], [0], [1], [0, 0, 1, 1], [], []>} : vector<8x64xf32>, vector<64x32xf32>, vector<8x32xf32> -> vector<8x32xf32>
    %c0_3 = arith.constant 0 : index
    %c0_4 = arith.constant 0 : index
    %3 = vector.load %arg3[%c0_3, %c0_4] : memref<1x32xf32, #tpu.memory_space<vmem>>, vector<1x32xf32>
    %4 = vector.broadcast %3 : vector<1x32xf32> to vector<8x32xf32>
    %5 = arith.addf %2, %4 : vector<8x32xf32>
    %c0_5 = arith.constant 0 : index
    %c0_6 = arith.constant 0 : index
    %6 = vector.load %arg4[%c0_5, %c0_6] : memref<8x32xf32, #tpu.memory_space<vmem>>, vector<8x32xf32>
    tpu.vector_store %arg4[%c0_5, %c0_6], %5 {strides = array<i32>} : memref<8x32xf32, #tpu.memory_space<vmem>>, vector<8x32xf32>,
    return
  }
  func.func @transform_0(%arg0: i32) -> (i32, i32) {
    %c0_i32 = arith.constant 0 : i32
    %c0_i32_0 = arith.constant 0 : i32
    return %arg0, %c0_i32 : i32, i32
  }
  func.func @transform_1(%arg0: i32) -> (i32, i32) {
    %c0_i32 = arith.constant 0 : i32
    %c0_i32_0 = arith.constant 0 : i32
    %c0_i32_1 = arith.constant 0 : i32
    return %c0_i32, %c0_i32_0 : i32, i32
  }
  func.func @transform_2(%arg0: i32) -> (i32, i32) {
    %c0_i32 = arith.constant 0 : i32
    %c0_i32_0 = arith.constant 0 : i32
    %c0_i32_1 = arith.constant 0 : i32
    return %c0_i32, %c0_i32_0 : i32, i32
  }
  func.func @transform_3(%arg0: i32) -> (i32, i32) {
    %c0_i32 = arith.constant 0 : i32
    %c0_i32_0 = arith.constant 0 : i32
    return %arg0, %c0_i32 : i32, i32
  }
}

</mosaic_0001>

<llo_original>
// kernel: tpu_custom_call.1
$region0: #{tpu_custom_call.1}
  #allocation0 [shape = 'u32[]', space=smem, size = 0x4, offset = 0x4, fixed_abs, tag = 'smem constant byte address 0x4 - core index']
  #allocation1 [shape = 'u32[72,128]{1,0:T(1,128)}', space=vmem, size = 0x9000, scoped, tag = 'internal scratch']
  %s0 = inlined_call_operand.vmem [shape: f32[8,64], index: 0, kind: input, shape index: {}]
  %s1 = inlined_call_operand.vmem [shape: f32[64,32], index: 1, kind: input, shape index: {}]
  %s2 = inlined_call_operand.vmem [shape: f32[1,32], index: 2, kind: input, shape index: {}]
  %s3 = inlined_call_operand.hbm [shape: f32[8,32], index: 3, kind: output, shape index: {}]
  %s4 = sld [smem:[#allocation0]]
  $region22: #{tpu_custom_call.1} parent=0
    _
  %s6 = ssub.s32 1, %s4
  %s7 = scalar_select 0, %s6, %s4
  $region1: #{tpu_custom_call.1} parent=0
    #allocation2 [shape = 'u8[4096]{0}', space=vmem, size = 0x1000, scoped, tag = 'output window, operand 0, single buffered']
    #allocation3 [shape = 's32[1]{0}', space=sflag, size = 0x4, scoped, tag = 'scoped memory for tpu_custom_call.1']
    %8 = vsyncpa [#allocation3], 0
    // Predicated region
    $region2: #{tpu_custom_call.1} parent=1 // pred_check
      _
    $region3: #{tpu_custom_call.1} parent=1 // pred_check_branch
      %10 = sbr.rel (0) target = $region5
    $region4: #{tpu_custom_call.1} parent=1 // pred_region
      _
    $region5: #{tpu_custom_call.1} parent=1 // pred_fallthru
      _
    // Predicated region
    $region6: #{tpu_custom_call.1} parent=1 // pred_check
      _
    $region7: #{tpu_custom_call.1} parent=1 // pred_check_branch
      %12 = sbr.rel (0) target = $region9
    $region8: #{tpu_custom_call.1} parent=1 // pred_region
      _
    $region9: #{tpu_custom_call.1} parent=1 // pred_fallthru
      _
    // Predicated region
    $region10: #{tpu_custom_call.1} parent=1 // pred_check
      _
    $region11: #{tpu_custom_call.1} parent=1 // pred_check_branch
      %14 = sbr.rel (0) target = $region13
    $region12: #{tpu_custom_call.1} parent=1 // pred_region
      _
    $region13: #{tpu_custom_call.1} parent=1 // pred_fallthru
      _
    %v15 = vld [vmem:[%s0] sm:$0xff]
    %v16 = vld [vmem:[%s1] sm:$0xff]
    %v17 = vld [vmem:[%s1 + $0x8] sm:$0xff]
    %v18 = vld [vmem:[%s1 + $0x10] sm:$0xff]
    %v19 = vld [vmem:[%s1 + $0x18] sm:$0xff]
    %v20 = vld [vmem:[%s1 + $0x20] sm:$0xff]
    %v21 = vld [vmem:[%s1 + $0x28] sm:$0xff]
    %v22 = vld [vmem:[%s1 + $0x30] sm:$0xff]
    %v23 = vld [vmem:[%s1 + $0x38] sm:$0xff]
    %v24 = vld [vmem:[%s2] sm:$0x1]
    %v26 = vperm.slane %v24, 0
    %vm28 = vcmask 523264
    %v30 = vsel %vm28, %v15, 0
    %32 = vmatpush.msra.mxu0 0.0
    %33 = vmatpush.msra.mxu0 0.0
    %34 = vmatpush.msra.mxu0 0.0
    %35 = vmatpush.msra.mxu0 0.0
    %36 = vmatpush.msra.mxu0 0.0
    %37 = vmatpush.msra.mxu0 0.0
    %38 = vmatpush.msra.mxu0 0.0
    %39 = vmatpush.msra.mxu0 0.0
    %40 = vmatpush.msra.mxu0 %v23
    %41 = vmatpush.msra.mxu0 %v22
    %42 = vmatpush.msra.mxu0 %v21
    %43 = vmatpush.msra.mxu0 %v20
    %44 = vmatpush.msra.mxu0 %v19
    %45 = vmatpush.msra.mxu0 %v18
    %46 = vmatpush.msra.mxu0 %v17
    %47 = vmatpush.msra.mxu0 %v16
    %48 = vmatmul.f32.gmra.mxu0 %v30
    %v49 = vpop.f32.mrf.mxu0
    %v50 = vadd.f32 %v26, %v49
    %51 = vdwg.mxu0
    %vm52 = vcmask 261120
    %53 = vst.msk [vmem:[#allocation2] sm:$0xff] %vm52, %v50
    // Predicated region
    $region14: #{tpu_custom_call.1} parent=1 // pred_check
      _
    $region15: #{tpu_custom_call.1} parent=1 // pred_check_branch
      %55 = sbr.rel (0) target = $region17
    $region16: #{tpu_custom_call.1} parent=1 // pred_region
      %57 = vsyncadd [#allocation3], 0
      %s59 = sshll.u32 [#allocation2], 4
      %s60 = int_to_ptr.vmem [resolvable:$true] %s59
      %s61 = sshll.u32 %s3, 4
      %s62 = int_to_ptr.hbm [resolvable:$true] %s61
      %64 = dma.vmem_to_hbm [thread:$0]  %s60, 128, %s62, [#allocation3]
    $region17: #{tpu_custom_call.1} parent=1 // pred_fallthru
      _
    // Predicated region
    $region18: #{tpu_custom_call.1} parent=1 // pred_check
      _
    $region19: #{tpu_custom_call.1} parent=1 // pred_check_branch
      %66 = sbr.rel (0) target = $region21
    $region20: #{tpu_custom_call.1} parent=1 // pred_region
      %68 = dma.done [#allocation3], 128
    $region21: #{tpu_custom_call.1} parent=1 // pred_fallthru
      _
    %69 = vsyncpa [#allocation3], 1

</llo_original>
